<compile_context>
chip_gen: v5e
topology: v5e:2x2
jax: 0.10.0
libtpu: 0.0.40
codegen_flags: <defaults>
</compile_context>

<pallas_src>
import functools

import jax
import jax.numpy as jnp
from jax.experimental import pallas as pl
from jax.experimental.pallas import tpu as pltpu


# ---------------------------------------------------------------------------
# Kernel: one (batch, row-tile) step of fused depthwise(3x3,'same') + 1x1.
# ---------------------------------------------------------------------------
def _dsc_kernel(xm_ref, xh_ref, em_ref, dww_ref, pww_ref, pwb_ref, o_ref):
    # xm_ref : (1, C, TS)        row tile, spatially flattened (TS = TH * W)
    # xh_ref : (1, 1, 2, C, W)   halo rows: [0] above, [1] below the tile
    #                            (already zero at the image top/bottom edges)
    # em_ref : (2, TS)           {0,1} masks: [0] "w-1 exists", [1] "w+1 exists"
    # dww_ref: (K, C, 9)         depthwise weights, tap index t = dy*3 + dx
    # pww_ref: (K, Cout, C)      pointwise weights (per kernels_per_layer slice)
    # pwb_ref: (Cout, 1)         effective pointwise bias (depthwise bias folded)
    # o_ref  : (1, Cout, TS)
    _, C, TS = xm_ref.shape
    W = xh_ref.shape[-1]
    K = dww_ref.shape[0]
    f32 = jnp.float32

    x_mid = xm_ref[0].astype(f32)               # (C, TS)
    x_top = xh_ref[0, 0, 0].astype(f32)         # (C, W)
    x_bot = xh_ref[0, 0, 1].astype(f32)         # (C, W)
    zc = jnp.zeros((C, 1), f32)

    # Halo-extended flat tile [pad1 | row above | tile | row below | pad1];
    # tap (dy, dx) of the 3x3 stencil is the static lane slice starting at
    # dy*W + dx.  Built once as a value -- no scratch stores, no zero-fill.
    x_ext = jnp.concatenate([zc, x_top, x_mid, x_bot, zc], axis=1)

    not_l = em_ref[0:1, :]                      # (1, TS): 0 where w == 0
    not_r = em_ref[1:2, :]                      # (1, TS): 0 where w == W-1

    y = None
    for k in range(K):                          # kernels_per_layer (static)
        acc = None                              # depthwise f32 accumulator
        for dx in range(3):
            part = None
            for dy in range(3):
                t = dy * 3 + dx
                start = dy * W + dx
                xs = x_ext[:, start:start + TS]              # (C, TS)
                w = dww_ref[k, :, t:t + 1]                    # (C, 1)
                term = xs * w                  # per-channel scale, lane-bcast
                part = term if part is None else part + term
            if dx == 0:                        # 'same' padding, left border
                part = part * not_l
            elif dx == 2:                      # 'same' padding, right border
                part = part * not_r
            acc = part if acc is None else acc + part

        pwk = pww_ref[k]                       # (Cout, C); dtype set in wrapper
        rhs = acc if acc.dtype == pwk.dtype else acc.astype(pwk.dtype)
        yk = jnp.dot(pwk, rhs, preferred_element_type=f32)    # MXU (Cout, TS)
        y = yk if y is None else y + yk

    y = y + pwb_ref[...]                       # (Cout, 1) bias, lane-broadcast
    o_ref[0] = y.astype(o_ref.dtype)           # lane-dense (unmasked) store


# ---------------------------------------------------------------------------
# Tiling / VMEM budgeting helpers
# ---------------------------------------------------------------------------
def _round_up(v, m):
    return -(-v // m) * m


def _vmem_limit_bytes():
    """Per-generation VMEM budget (v7x: 64 MiB/TC physical, v5e/v6e: 128 MiB)."""
    try:
        cap = int(getattr(pltpu.get_tpu_info(), "vmem_capacity_bytes", 0) or 0)
    except Exception:
        cap = 0
    if cap <= 0:
        cap = 64 * 1024 * 1024                  # conservative (v7x-sized) default
    return min((cap * 3) // 4, 64 * 1024 * 1024)


def _pick_row_tile(N, H, W, C, K, Cout, itemsize, vmem_budget,
                   max_tile_bytes=4 * 1024 * 1024, min_steps=8):
    """Largest divisor TH of H with (TH*W) % 128 == 0 (or TH == H) whose
    modelled working set (double-buffered blocks + in-kernel f32 temporaries +
    resident weights) fits the budget, whose I/O payload stays a few MiB, and
    that still leaves >= min_steps grid steps for pipelining / megacore."""
    cs, cos = _round_up(C, 8), _round_up(Cout, 8)
    wl = _round_up(W, 128)

    def footprint(th):
        ts = _round_up(th * W, 128)
        x_blk = cs * ts * itemsize
        halo_blk = 2 * cs * wl * itemsize
        o_blk = cos * ts * itemsize
        pipeline = 2 * (x_blk + halo_blk + o_blk)            # double-buffered
        weights = (K * (cs * 128 + cos * _round_up(C, 128))
                   + cos * 128 + 8 * ts) * 4
        temps = (cs * _round_up(th * W + 2 * W + 2, 128)     # x_ext
                 + 3 * cs * ts                               # tap / part / acc
                 + cos * ts) * 4                             # y
        return int(1.25 * (pipeline + temps)) + weights

    def payload(th):
        ts = _round_up(th * W, 128)
        return (cs + cos) * ts * itemsize

    cands = sorted(th for th in range(1, H + 1)
                   if H % th == 0 and ((th * W) % 128 == 0 or th == H))
    ok = [th for th in cands
          if footprint(th) <= vmem_budget and payload(th) <= max_tile_bytes]
    if not ok:
        ok = [cands[0]]
    stepped = [th for th in ok if N * (H // th) >= min_steps]
    return max(stepped) if stepped else min(ok)


def _build_halo(x, row_tile):
    """(N, n_rt, 2, C, W): single rows just above / below each row tile,
    zero at the image top / bottom edges.  ~2/TH of x in extra HBM traffic."""
    N, C, H, W = x.shape
    zero_row = jnp.zeros((N, C, 1, W), x.dtype)
    above = x[:, :, row_tile - 1:H - 1:row_tile, :]           # (N, C, n_rt-1, W)
    below = x[:, :, row_tile:H:row_tile, :]                   # (N, C, n_rt-1, W)
    top = jnp.concatenate([zero_row, above], axis=2)          # (N, C, n_rt, W)
    bot = jnp.concatenate([below, zero_row], axis=2)          # (N, C, n_rt, W)
    halo = jnp.stack([top, bot], axis=3)                      # (N, C, n_rt, 2, W)
    return jnp.transpose(halo, (0, 2, 3, 1, 4))               # (N, n_rt, 2, C, W)


def _convert_torch_params(depthwise_weight, depthwise_bias, pointwise_weight,
                          pointwise_bias, nin, pointwise_dtype=None):
    """PyTorch (Cmid,1,3,3)/(Cmid,)/(Cout,Cmid,1,1)/(Cout,) -> kernel layouts.
    All casts hoisted here; depthwise bias folded into the pointwise bias."""
    c_mid = int(depthwise_weight.shape[0])
    if c_mid % nin != 0:
        raise ValueError("depthwise out-channels must be a multiple of nin")
    K = c_mid // nin
    cout = int(pointwise_weight.shape[0])
    f32 = jnp.float32
    # PyTorch group order: depthwise out-channel m = c*K + k (c = input chan).
    dw = depthwise_weight.astype(f32).reshape(c_mid, 9)            # (Cmid, 9)
    dw = dw.reshape(nin, K, 9).transpose(1, 0, 2)                  # (K, C, 9)
    pw2d = pointwise_weight.astype(f32).reshape(cout, c_mid)       # (Cout, Cmid)
    pw = pw2d.reshape(cout, nin, K).transpose(2, 0, 1)             # (K, Cout, C)
    if pointwise_dtype is not None:
        pw = pw.astype(pointwise_dtype)                            # opt-in bf16
    pwb = (pw2d @ depthwise_bias.astype(f32)
           + pointwise_bias.astype(f32)).reshape(cout, 1)          # exact fold
    return dw, pw, pwb, K


# ---------------------------------------------------------------------------
# PyTorch-parity wrapper: NCHW in / NCHW out, PyTorch weight shapes.
# ---------------------------------------------------------------------------
def depthwise_separable_conv(x_nchw, depthwise_weight, depthwise_bias,
                             pointwise_weight, pointwise_bias, *,
                             kernels_per_layer=None, row_tile=None,
                             pointwise_dtype=None):
    N, C_in, H, W = x_nchw.shape
    dw, pw, pwb, K = _convert_torch_params(
        depthwise_weight, depthwise_bias, pointwise_weight, pointwise_bias,
        C_in, pointwise_dtype)
    if kernels_per_layer is not None and kernels_per_layer != K:
        raise ValueError("kernels_per_layer inconsistent with depthwise weights")
    Cout = pw.shape[1]

    vmem_budget = _vmem_limit_bytes()
    TH = row_tile if row_tile is not None else _pick_row_tile(
        N, H, W, C_in, K, Cout, x_nchw.dtype.itemsize, vmem_budget)
    if H % TH != 0 or ((TH * W) % 128 != 0 and TH != H):
        raise ValueError(f"row_tile={TH} must divide H={H} and give a "
                         "lane-aligned tile ((TH*W) % 128 == 0) unless TH == H")
    n_rt = H // TH
    TS = TH * W

    x_flat = x_nchw.reshape(N, C_in, H * W)            # free, row-major
    halo = _build_halo(x_nchw, TH)                     # (N, n_rt, 2, C, W)
    w_idx = jnp.arange(TS, dtype=jnp.int32) % W
    edge_mask = jnp.stack([(w_idx != 0),
                           (w_idx != W - 1)]).astype(jnp.float32)   # (2, TS)

    out = pl.pallas_call(
        _dsc_kernel,
        out_shape=jax.ShapeDtypeStruct((N, Cout, H * W), x_nchw.dtype),
        grid=(N, n_rt),
        in_specs=[
            pl.BlockSpec((1, C_in, TS), lambda n, rt: (n, 0, rt)),
            pl.BlockSpec((1, 1, 2, C_in, W), lambda n, rt: (n, rt, 0, 0, 0)),
            pl.BlockSpec((2, TS), lambda n, rt: (0, 0)),
            pl.BlockSpec((K, C_in, 9), lambda n, rt: (0, 0, 0)),
            pl.BlockSpec((K, Cout, C_in), lambda n, rt: (0, 0, 0)),
            pl.BlockSpec((Cout, 1), lambda n, rt: (0, 0)),
        ],
        out_specs=pl.BlockSpec((1, Cout, TS), lambda n, rt: (n, 0, rt)),
        compiler_params=pltpu.CompilerParams(
            dimension_semantics=("parallel", "parallel"),
            vmem_limit_bytes=int(vmem_budget)),
    )(x_flat, halo, edge_mask, dw, pw, pwb)

    return out.reshape(N, Cout, H, W)


# ---------------------------------------------------------------------------
# Pure-JAX reference (emulates the PyTorch module exactly) + demo
# ---------------------------------------------------------------------------
def _reference_nchw(x, dw_w, dw_b, pw_w, pw_b, groups):
    hi = jax.lax.Precision.HIGHEST
    y = jax.lax.conv_general_dilated(
        x, dw_w, window_strides=(1, 1), padding="SAME",
        dimension_numbers=("NCHW", "OIHW", "NCHW"),
        feature_group_count=groups, precision=hi)
    y = y + dw_b[None, :, None, None]
    z = jax.lax.conv_general_dilated(
        y, pw_w, window_strides=(1, 1), padding="VALID",
        dimension_numbers=("NCHW", "OIHW", "NCHW"), precision=hi)
    return z + pw_b[None, :, None, None]


if __name__ == "__main__":
    batch, nin, nout, spatial = 2, 4, 8, 16

    def make_case(kernels_per_layer):
        c_mid = nin * kernels_per_layer
        ks = jax.random.split(jax.random.PRNGKey(0), 5)
        x = jax.random.normal(ks[0], (batch, nin, spatial, spatial), jnp.float32)
        dw_w = 0.2 * jax.random.normal(ks[1], (c_mid, 1, 3, 3), jnp.float32)
        dw_b = 0.2 * jax.random.normal(ks[2], (c_mid,), jnp.float32)
        pw_w = 0.2 * jax.random.normal(ks[3], (nout, c_mid, 1, 1), jnp.float32)
        pw_b = 0.2 * jax.random.normal(ks[4], (nout,), jnp.float32)
        return x, dw_w, dw_b, pw_w, pw_b

    # Case 1: kernels_per_layer=1, row_tile=8 on a 16-row image -> 2 row tiles,
    # exercising both the zero (image-edge) and real (interior) halo rows.
    x, dw_w, dw_b, pw_w, pw_b = make_case(1)
    fwd = jax.jit(functools.partial(depthwise_separable_conv, row_tile=8))
    out = jax.block_until_ready(fwd(x, dw_w, dw_b, pw_w, pw_b))
    ref = _reference_nchw(x, dw_w, dw_b, pw_w, pw_b, groups=nin)
    assert out.shape == (batch, nout, spatial, spatial), out.shape
    assert out.dtype == jnp.float32, out.dtype
    err1 = float(jnp.max(jnp.abs(out - ref)))
    assert err1 < 1e-4, f"kernels_per_layer=1: max abs error {err1}"

    # Case 2: kernels_per_layer=2 (2 depthwise filters per input channel),
    # auto-picked row tile.
    x2, dw_w2, dw_b2, pw_w2, pw_b2 = make_case(2)
    fwd2 = jax.jit(depthwise_separable_conv)
    out2 = jax.block_until_ready(fwd2(x2, dw_w2, dw_b2, pw_w2, pw_b2))
    ref2 = _reference_nchw(x2, dw_w2, dw_b2, pw_w2, pw_b2, groups=nin)
    err2 = float(jnp.max(jnp.abs(out2 - ref2)))
    assert err2 < 1e-4, f"kernels_per_layer=2: max abs error {err2}"

    print("KERNEL_OK")
</pallas_src>

<mosaic_0001>
module attributes {stable_mosaic.version = 11 : i64} {
  func.func @_dsc_kernel(%arg0: i32, %arg1: i32, %arg2: memref<1x4x128xf32, #tpu.memory_space<vmem>>, %arg3: memref<1x1x2x4x16xf32, #tpu.memory_space<vmem>>, %arg4: memref<2x128xf32, #tpu.memory_space<vmem>>, %arg5: memref<1x4x9xf32, #tpu.memory_space<vmem>>, %arg6: memref<1x8x4xf32, #tpu.memory_space<vmem>>, %arg7: memref<8x1xf32, #tpu.memory_space<vmem>>, %arg8: memref<1x8x128xf32, #tpu.memory_space<vmem>>) attributes {dimension_semantics = [#tpu.dimension_semantics<parallel>, #tpu.dimension_semantics<parallel>], iteration_bounds = array<i64: 2, 2>, scalar_prefetch = 0 : i64, scratch_operands = 0 : i64, tpu.core_type = #tpu.core_type<tc>, window_params = [{transform_indices = @transform_0, window_bounds = array<i64: 1, 4, 128>}, {transform_indices = @transform_1, window_bounds = array<i64: 1, 1, 2, 4, 16>}, {pipeline_mode = #tpu.pipeline_mode<synchronous>, transform_indices = @transform_2, window_bounds = array<i64: 2, 128>}, {pipeline_mode = #tpu.pipeline_mode<synchronous>, transform_indices = @transform_3, window_bounds = array<i64: 1, 4, 9>}, {pipeline_mode = #tpu.pipeline_mode<synchronous>, transform_indices = @transform_4, window_bounds = array<i64: 1, 8, 4>}, {pipeline_mode = #tpu.pipeline_mode<synchronous>, transform_indices = @transform_5, window_bounds = array<i64: 8, 1>}, {transform_indices = @transform_6, window_bounds = array<i64: 1, 8, 128>}]} {
    %c0 = arith.constant 0 : index
    %c0_0 = arith.constant 0 : index
    %c0_1 = arith.constant 0 : index
    %0 = vector.load %arg2[%c0, %c0_0, %c0_1] : memref<1x4x128xf32, #tpu.memory_space<vmem>>, vector<1x4x128xf32>
    %1 = vector.shape_cast %0 : vector<1x4x128xf32> to vector<4x128xf32>
    %c0_2 = arith.constant 0 : index
    %c0_3 = arith.constant 0 : index
    %c0_4 = arith.constant 0 : index
    %c0_5 = arith.constant 0 : index
    %c0_6 = arith.constant 0 : index
    %2 = vector.load %arg3[%c0_2, %c0_3, %c0_4, %c0_5, %c0_6] : memref<1x1x2x4x16xf32, #tpu.memory_space<vmem>>, vector<1x1x1x4x16xf32>
    %3 = vector.shape_cast %2 : vector<1x1x1x4x16xf32> to vector<4x16xf32>
    %c0_7 = arith.constant 0 : index
    %c0_8 = arith.constant 0 : index
    %c1 = arith.constant 1 : index
    %c0_9 = arith.constant 0 : index
    %c0_10 = arith.constant 0 : index
    %4 = vector.load %arg3[%c0_7, %c0_8, %c1, %c0_9, %c0_10] : memref<1x1x2x4x16xf32, #tpu.memory_space<vmem>>, vector<1x1x1x4x16xf32>
    %5 = vector.shape_cast %4 : vector<1x1x1x4x16xf32> to vector<4x16xf32>
    %cst = arith.constant 0.000000e+00 : f32
    %6 = vector.broadcast %cst : f32 to vector<4x1xf32>
    %7 = tpu.concatenate %6, %3, %1, %5, %6 in 1 : vector<4x1xf32>, vector<4x16xf32>, vector<4x128xf32>, vector<4x16xf32>, vector<4x1xf32> -> vector<4x162xf32>
    %c0_11 = arith.constant 0 : index
    %c0_12 = arith.constant 0 : index
    %8 = vector.load %arg4[%c0_11, %c0_12] : memref<2x128xf32, #tpu.memory_space<vmem>>, vector<1x128xf32>
    %c1_13 = arith.constant 1 : index
    %c0_14 = arith.constant 0 : index
    %9 = vector.load %arg4[%c1_13, %c0_14] : memref<2x128xf32, #tpu.memory_space<vmem>>, vector<1x128xf32>
    %10 = vector.extract_strided_slice %7 {offsets = [0, 0], sizes = [4, 128], strides = [1, 1]} : vector<4x162xf32> to vector<4x128xf32>
    %c0_15 = arith.constant 0 : index
    %c0_16 = arith.constant 0 : index
    %c0_17 = arith.constant 0 : index
    %11 = vector.load %arg5[%c0_15, %c0_16, %c0_17] : memref<1x4x9xf32, #tpu.memory_space<vmem>>, vector<1x4x1xf32>
    %12 = vector.shape_cast %11 : vector<1x4x1xf32> to vector<4x1xf32>
    %13 = vector.broadcast %12 : vector<4x1xf32> to vector<4x128xf32>
    %14 = arith.mulf %10, %13 : vector<4x128xf32>
    %15 = vector.extract_strided_slice %7 {offsets = [0, 16], sizes = [4, 128], strides = [1, 1]} : vector<4x162xf32> to vector<4x128xf32>
    %c0_18 = arith.constant 0 : index
    %c0_19 = arith.constant 0 : index
    %c3 = arith.constant 3 : index
    %16 = vector.load %arg5[%c0_18, %c0_19, %c3] : memref<1x4x9xf32, #tpu.memory_space<vmem>>, vector<1x4x1xf32>
    %17 = vector.shape_cast %16 : vector<1x4x1xf32> to vector<4x1xf32>
    %18 = vector.broadcast %17 : vector<4x1xf32> to vector<4x128xf32>
    %19 = arith.mulf %15, %18 : vector<4x128xf32>
    %20 = arith.addf %14, %19 : vector<4x128xf32>
    %21 = vector.extract_strided_slice %7 {offsets = [0, 32], sizes = [4, 128], strides = [1, 1]} : vector<4x162xf32> to vector<4x128xf32>
    %c0_20 = arith.constant 0 : index
    %c0_21 = arith.constant 0 : index
    %c6 = arith.constant 6 : index
    %22 = vector.load %arg5[%c0_20, %c0_21, %c6] : memref<1x4x9xf32, #tpu.memory_space<vmem>>, vector<1x4x1xf32>
    %23 = vector.shape_cast %22 : vector<1x4x1xf32> to vector<4x1xf32>
    %24 = vector.broadcast %23 : vector<4x1xf32> to vector<4x128xf32>
    %25 = arith.mulf %21, %24 : vector<4x128xf32>
    %26 = arith.addf %20, %25 : vector<4x128xf32>
    %27 = vector.broadcast %8 : vector<1x128xf32> to vector<4x128xf32>
    %28 = arith.mulf %26, %27 : vector<4x128xf32>
    %29 = vector.extract_strided_slice %7 {offsets = [0, 1], sizes = [4, 128], strides = [1, 1]} : vector<4x162xf32> to vector<4x128xf32>
    %c0_22 = arith.constant 0 : index
    %c0_23 = arith.constant 0 : index
    %c1_24 = arith.constant 1 : index
    %30 = vector.load %arg5[%c0_22, %c0_23, %c1_24] : memref<1x4x9xf32, #tpu.memory_space<vmem>>, vector<1x4x1xf32>
    %31 = vector.shape_cast %30 : vector<1x4x1xf32> to vector<4x1xf32>
    %32 = vector.broadcast %31 : vector<4x1xf32> to vector<4x128xf32>
    %33 = arith.mulf %29, %32 : vector<4x128xf32>
    %34 = vector.extract_strided_slice %7 {offsets = [0, 17], sizes = [4, 128], strides = [1, 1]} : vector<4x162xf32> to vector<4x128xf32>
    %c0_25 = arith.constant 0 : index
    %c0_26 = arith.constant 0 : index
    %c4 = arith.constant 4 : index
    %35 = vector.load %arg5[%c0_25, %c0_26, %c4] : memref<1x4x9xf32, #tpu.memory_space<vmem>>, vector<1x4x1xf32>
    %36 = vector.shape_cast %35 : vector<1x4x1xf32> to vector<4x1xf32>
    %37 = vector.broadcast %36 : vector<4x1xf32> to vector<4x128xf32>
    %38 = arith.mulf %34, %37 : vector<4x128xf32>
    %39 = arith.addf %33, %38 : vector<4x128xf32>
    %40 = vector.extract_strided_slice %7 {offsets = [0, 33], sizes = [4, 128], strides = [1, 1]} : vector<4x162xf32> to vector<4x128xf32>
    %c0_27 = arith.constant 0 : index
    %c0_28 = arith.constant 0 : index
    %c7 = arith.constant 7 : index
    %41 = vector.load %arg5[%c0_27, %c0_28, %c7] : memref<1x4x9xf32, #tpu.memory_space<vmem>>, vector<1x4x1xf32>
    %42 = vector.shape_cast %41 : vector<1x4x1xf32> to vector<4x1xf32>
    %43 = vector.broadcast %42 : vector<4x1xf32> to vector<4x128xf32>
    %44 = arith.mulf %40, %43 : vector<4x128xf32>
    %45 = arith.addf %39, %44 : vector<4x128xf32>
    %46 = arith.addf %28, %45 : vector<4x128xf32>
    %47 = vector.extract_strided_slice %7 {offsets = [0, 2], sizes = [4, 128], strides = [1, 1]} : vector<4x162xf32> to vector<4x128xf32>
    %c0_29 = arith.constant 0 : index
    %c0_30 = arith.constant 0 : index
    %c2 = arith.constant 2 : index
    %48 = vector.load %arg5[%c0_29, %c0_30, %c2] : memref<1x4x9xf32, #tpu.memory_space<vmem>>, vector<1x4x1xf32>
    %49 = vector.shape_cast %48 : vector<1x4x1xf32> to vector<4x1xf32>
    %50 = vector.broadcast %49 : vector<4x1xf32> to vector<4x128xf32>
    %51 = arith.mulf %47, %50 : vector<4x128xf32>
    %52 = vector.extract_strided_slice %7 {offsets = [0, 18], sizes = [4, 128], strides = [1, 1]} : vector<4x162xf32> to vector<4x128xf32>
    %c0_31 = arith.constant 0 : index
    %c0_32 = arith.constant 0 : index
    %c5 = arith.constant 5 : index
    %53 = vector.load %arg5[%c0_31, %c0_32, %c5] : memref<1x4x9xf32, #tpu.memory_space<vmem>>, vector<1x4x1xf32>
    %54 = vector.shape_cast %53 : vector<1x4x1xf32> to vector<4x1xf32>
    %55 = vector.broadcast %54 : vector<4x1xf32> to vector<4x128xf32>
    %56 = arith.mulf %52, %55 : vector<4x128xf32>
    %57 = arith.addf %51, %56 : vector<4x128xf32>
    %58 = vector.extract_strided_slice %7 {offsets = [0, 34], sizes = [4, 128], strides = [1, 1]} : vector<4x162xf32> to vector<4x128xf32>
    %c0_33 = arith.constant 0 : index
    %c0_34 = arith.constant 0 : index
    %c8 = arith.constant 8 : index
    %59 = vector.load %arg5[%c0_33, %c0_34, %c8] : memref<1x4x9xf32, #tpu.memory_space<vmem>>, vector<1x4x1xf32>
    %60 = vector.shape_cast %59 : vector<1x4x1xf32> to vector<4x1xf32>
    %61 = vector.broadcast %60 : vector<4x1xf32> to vector<4x128xf32>
    %62 = arith.mulf %58, %61 : vector<4x128xf32>
    %63 = arith.addf %57, %62 : vector<4x128xf32>
    %64 = vector.broadcast %9 : vector<1x128xf32> to vector<4x128xf32>
    %65 = arith.mulf %63, %64 : vector<4x128xf32>
    %66 = arith.addf %46, %65 : vector<4x128xf32>
    %c0_35 = arith.constant 0 : index
    %c0_36 = arith.constant 0 : index
    %c0_37 = arith.constant 0 : index
    %67 = vector.load %arg6[%c0_35, %c0_36, %c0_37] : memref<1x8x4xf32, #tpu.memory_space<vmem>>, vector<1x8x4xf32>
    %68 = vector.shape_cast %67 : vector<1x8x4xf32> to vector<8x4xf32>
    %cst_38 = arith.constant dense<0.000000e+00> : vector<8x128xf32>
    %69 = tpu.matmul %68, %66, %cst_38 {dimension_numbers = #tpu.dot_dimension_numbers<[1], [0], [0], [1], [0, 0, 1, 1], [], []>} : vector<8x4xf32>, vector<4x128xf32>, vector<8x128xf32> -> vector<8x128xf32>
    %c0_39 = arith.constant 0 : index
    %c0_40 = arith.constant 0 : index
    %70 = vector.load %arg7[%c0_39, %c0_40] : memref<8x1xf32, #tpu.memory_space<vmem>>, vector<8x1xf32>
    %71 = vector.broadcast %70 : vector<8x1xf32> to vector<8x128xf32>
    %72 = arith.addf %69, %71 : vector<8x128xf32>
    %c0_41 = arith.constant 0 : index
    %c0_42 = arith.constant 0 : index
    %c0_43 = arith.constant 0 : index
    %73 = vector.load %arg8[%c0_41, %c0_42, %c0_43] : memref<1x8x128xf32, #tpu.memory_space<vmem>>, vector<1x8x128xf32>
    %74 = vector.shape_cast %73 : vector<1x8x128xf32> to vector<8x128xf32>
    %75 = vector.shape_cast %72 : vector<8x128xf32> to vector<1x8x128xf32>
    tpu.vector_store %arg8[%c0_41, %c0_42, %c0_43], %75 {strides = array<i32>} : memref<1x8x128xf32, #tpu.memory_space<vmem>>, vector<1x8x128xf32>,
    return
  }
  func.func @transform_0(%arg0: i32, %arg1: i32) -> (i32, i32, i32) {
    %c0_i32 = arith.constant 0 : i32
    %c0_i32_0 = arith.constant 0 : i32
    return %arg0, %c0_i32, %arg1 : i32, i32, i32
  }
  func.func @transform_1(%arg0: i32, %arg1: i32) -> (i32, i32, i32, i32, i32) {
    %c0_i32 = arith.constant 0 : i32
    %c0_i32_0 = arith.constant 0 : i32
    %c0_i32_1 = arith.constant 0 : i32
    %c0_i32_2 = arith.constant 0 : i32
    return %arg0, %arg1, %c0_i32, %c0_i32_0, %c0_i32_1 : i32, i32, i32, i32, i32
  }
  func.func @transform_2(%arg0: i32, %arg1: i32) -> (i32, i32) {
    %c0_i32 = arith.constant 0 : i32
    %c0_i32_0 = arith.constant 0 : i32
    %c0_i32_1 = arith.constant 0 : i32
    return %c0_i32, %c0_i32_0 : i32, i32
  }
  func.func @transform_3(%arg0: i32, %arg1: i32) -> (i32, i32, i32) {
    %c0_i32 = arith.constant 0 : i32
    %c0_i32_0 = arith.constant 0 : i32
    %c0_i32_1 = arith.constant 0 : i32
    %c0_i32_2 = arith.constant 0 : i32
    return %c0_i32, %c0_i32_0, %c0_i32_1 : i32, i32, i32
  }
  func.func @transform_4(%arg0: i32, %arg1: i32) -> (i32, i32, i32) {
    %c0_i32 = arith.constant 0 : i32
    %c0_i32_0 = arith.constant 0 : i32
    %c0_i32_1 = arith.constant 0 : i32
    %c0_i32_2 = arith.constant 0 : i32
    return %c0_i32, %c0_i32_0, %c0_i32_1 : i32, i32, i32
  }
  func.func @transform_5(%arg0: i32, %arg1: i32) -> (i32, i32) {
    %c0_i32 = arith.constant 0 : i32
    %c0_i32_0 = arith.constant 0 : i32
    %c0_i32_1 = arith.constant 0 : i32
    return %c0_i32, %c0_i32_0 : i32, i32
  }
  func.func @transform_6(%arg0: i32, %arg1: i32) -> (i32, i32, i32) {
    %c0_i32 = arith.constant 0 : i32
    %c0_i32_0 = arith.constant 0 : i32
    return %arg0, %c0_i32, %arg1 : i32, i32, i32
  }
}

</mosaic_0001>

<llo_original>
// kernel: depthwise_separable_conv.1
$region0: #{depthwise_separable_conv.1}
  #allocation0 [shape = 'u32[]', space=smem, size = 0x4, offset = 0x4, fixed_abs, tag = 'smem constant byte address 0x4 - core index']
  #allocation1 [shape = 'u32[72,128]{1,0:T(1,128)}', space=vmem, size = 0x9000, scoped, tag = 'internal scratch']
  %s0 = inlined_call_operand.vmem [shape: f32[2,4,256], index: 0, kind: input, shape index: {}]
  %s1 = inlined_call_operand.vmem [shape: f32[2,2,2,4,16], index: 1, kind: input, shape index: {}]
  %s2 = inlined_call_operand.vmem [shape: f32[2,128], index: 2, kind: input, shape index: {}]
  %s3 = inlined_call_operand.vmem [shape: f32[1,4,9], index: 3, kind: input, shape index: {}]
  %s4 = inlined_call_operand.vmem [shape: f32[1,8,4], index: 4, kind: input, shape index: {}]
  %s5 = inlined_call_operand.vmem [shape: f32[8,1], index: 5, kind: input, shape index: {}]
  %s6 = inlined_call_operand.vmem [shape: f32[2,8,256], index: 6, kind: output, shape index: {}]
  %s7 = sld [smem:[#allocation0]]
  $region57: #{depthwise_separable_conv.1} parent=0
    _
  %s9 = ssub.s32 1, %s7
  %s10 = scalar_select 0, %s9, %s7
  loop: start=0, step=1, limit=6
  $region2: #{depthwise_separable_conv.1} parent=0 // loop_pre_header
    _
  $region3: #{depthwise_separable_conv.1} parent=0 // loop_header
    %s12 = sphi 0, %s16
    %p13 = scmp.ge.s32.totalorder %s12, 6
    %s19 = sphi 0, %s31
    %s20 = sphi 0, %s27
    %s21 = sphi 0, %s19
    %s22 = sphi 0, %s20
    %s23 = sphi 0, %s21
    %s24 = sphi 0, %s22
    %s36 = sphi 0, %s38
    %s39 = sphi 0, %s36
    %s40 = sphi 0, %s39
    %s56 = sphi 0, %s40
    %s64 = sphi 0, %s66
    %s67 = sphi 0, %s64
    %s68 = sphi 0, %s67
    %s84 = sphi 0, %s68
    %s88 = sphi 0, %s88
    %s90 = sphi 0, %s88
    %s91 = sphi 0, %s90
    %s105 = sphi 0, %s91
    %s109 = sphi 0, %s109
    %s111 = sphi 0, %s109
    %s112 = sphi 0, %s111
    %s126 = sphi 0, %s112
    %s130 = sphi 0, %s130
    %s132 = sphi 0, %s130
    %s133 = sphi 0, %s132
    %s147 = sphi 0, %s133
    %s151 = sphi 0, %s151
    %s153 = sphi 0, %s151
    %s154 = sphi 0, %s153
    %s168 = sphi 0, %s154
    %s176 = sphi 0, %s178
    %s179 = sphi 0, %s176
    %s180 = sphi 0, %s179
    %s196 = sphi 0, %s180
  $region4: #{depthwise_separable_conv.1} parent=0 // loop_header_branch
    %15 = sbr.rel (%p13) target = $region8
  $region5: #{depthwise_separable_conv.1} parent=0 // loop_body
    %s17 = ssub.s32 %s12, 1
    %s18 = ssub.s32 %s12, 2
    %s25 = sadd.s32 1, %s20
    %p26 = scmp.ge.s32.totalorder %s25, 2
    %s27 = scalar_select %p26, 0, %s25
    %s28 = sadd.s32 1, %s19
    %s29 = scalar_select %p26, %s28, %s19
    %p30 = scmp.ge.s32.totalorder %s29, 2
    %s31 = scalar_select %p30, 0, %s29
    %s32 = ssub.s32 %s19, %s31
    %s33 = ssub.s32 %s20, %s27
    %s34 = sor.u32 %s32, %s33
    %p35 = scmp.eq.s32.totalorder %s34, 0
    %s37 = sadd.s32 %s36, 1
    %s38 = scalar_select %p35, %s36, %s37
    %p41 = pneg %p35
    %p42 = scmp.eq.s32.totalorder %s12, 3
    %p43 = por %p41, %p42
    %p44 = scmp.ne.s32.totalorder %s36, %s39
    %p45 = scmp.eq.s32.totalorder %s12, 0
    %p46 = por %p44, %p45
    %p47 = scmp.ne.s32.totalorder %s36, %s39
    %p48 = scmp.eq.s32.totalorder %s17, 3
    %p49 = por %p47, %p48
    %p50 = scmp.ne.s32.totalorder %s39, %s40
    %p51 = scmp.eq.s32.totalorder %s17, 0
    %p52 = por %p50, %p51
    %p53 = scmp.ne.s32.totalorder %s39, %s40
    %p54 = scmp.eq.s32.totalorder %s18, 3
    %p55 = por %p53, %p54
    %p57 = scmp.ne.s32.totalorder %s40, %s56
    %p58 = scmp.eq.s32.totalorder %s18, 0
    %p59 = por %p57, %p58
    %s60 = ssub.s32 %s19, %s31
    %s61 = ssub.s32 %s20, %s27
    %s62 = sor.u32 %s60, %s61
    %p63 = scmp.eq.s32.totalorder %s62, 0
    %s65 = sadd.s32 %s64, 1
    %s66 = scalar_select %p63, %s64, %s65
    %p69 = pneg %p63
    %p70 = scmp.eq.s32.totalorder %s12, 3
    %p71 = por %p69, %p70
    %p72 = scmp.ne.s32.totalorder %s64, %s67
    %p73 = scmp.eq.s32.totalorder %s12, 0
    %p74 = por %p72, %p73
    %p75 = scmp.ne.s32.totalorder %s64, %s67
    %p76 = scmp.eq.s32.totalorder %s17, 3
    %p77 = por %p75, %p76
    %p78 = scmp.ne.s32.totalorder %s67, %s68
    %p79 = scmp.eq.s32.totalorder %s17, 0
    %p80 = por %p78, %p79
    %p81 = scmp.ne.s32.totalorder %s67, %s68
    %p82 = scmp.eq.s32.totalorder %s18, 3
    %p83 = por %p81, %p82
    %p85 = scmp.ne.s32.totalorder %s68, %s84
    %p86 = scmp.eq.s32.totalorder %s18, 0
    %p87 = por %p85, %p86
    %s89 = sadd.s32 %s88, 1
    %p92 = scmp.eq.s32.totalorder %s12, 3
    %p93 = scmp.ne.s32.totalorder %s88, %s90
    %p94 = scmp.eq.s32.totalorder %s12, 0
    %p95 = por %p93, %p94
    %p96 = scmp.ne.s32.totalorder %s88, %s90
    %p97 = scmp.eq.s32.totalorder %s17, 3
    %p98 = por %p96, %p97
    %p99 = scmp.ne.s32.totalorder %s90, %s91
    %p100 = scmp.eq.s32.totalorder %s17, 0
    %p101 = por %p99, %p100
    %p102 = scmp.ne.s32.totalorder %s90, %s91
    %p103 = scmp.eq.s32.totalorder %s18, 3
    %p104 = por %p102, %p103
    %p106 = scmp.ne.s32.totalorder %s91, %s105
    %p107 = scmp.eq.s32.totalorder %s18, 0
    %p108 = por %p106, %p107
    %s110 = sadd.s32 %s109, 1
    %p113 = scmp.eq.s32.totalorder %s12, 3
    %p114 = scmp.ne.s32.totalorder %s109, %s111
    %p115 = scmp.eq.s32.totalorder %s12, 0
    %p116 = por %p114, %p115
    %p117 = scmp.ne.s32.totalorder %s109, %s111
    %p118 = scmp.eq.s32.totalorder %s17, 3
    %p119 = por %p117, %p118
    %p120 = scmp.ne.s32.totalorder %s111, %s112
    %p121 = scmp.eq.s32.totalorder %s17, 0
    %p122 = por %p120, %p121
    %p123 = scmp.ne.s32.totalorder %s111, %s112
    %p124 = scmp.eq.s32.totalorder %s18, 3
    %p125 = por %p123, %p124
    %p127 = scmp.ne.s32.totalorder %s112, %s126
    %p128 = scmp.eq.s32.totalorder %s18, 0
    %p129 = por %p127, %p128
    %s131 = sadd.s32 %s130, 1
    %p134 = scmp.eq.s32.totalorder %s12, 3
    %p135 = scmp.ne.s32.totalorder %s130, %s132
    %p136 = scmp.eq.s32.totalorder %s12, 0
    %p137 = por %p135, %p136
    %p138 = scmp.ne.s32.totalorder %s130, %s132
    %p139 = scmp.eq.s32.totalorder %s17, 3
    %p140 = por %p138, %p139
    %p141 = scmp.ne.s32.totalorder %s132, %s133
    %p142 = scmp.eq.s32.totalorder %s17, 0
    %p143 = por %p141, %p142
    %p144 = scmp.ne.s32.totalorder %s132, %s133
    %p145 = scmp.eq.s32.totalorder %s18, 3
    %p146 = por %p144, %p145
    %p148 = scmp.ne.s32.totalorder %s133, %s147
    %p149 = scmp.eq.s32.totalorder %s18, 0
    %p150 = por %p148, %p149
    %s152 = sadd.s32 %s151, 1
    %p155 = scmp.eq.s32.totalorder %s12, 3
    %p156 = scmp.ne.s32.totalorder %s151, %s153
    %p157 = scmp.eq.s32.totalorder %s12, 0
    %p158 = por %p156, %p157
    %p159 = scmp.ne.s32.totalorder %s151, %s153
    %p160 = scmp.eq.s32.totalorder %s17, 3
    %p161 = por %p159, %p160
    %p162 = scmp.ne.s32.totalorder %s153, %s154
    %p163 = scmp.eq.s32.totalorder %s17, 0
    %p164 = por %p162, %p163
    %p165 = scmp.ne.s32.totalorder %s153, %s154
    %p166 = scmp.eq.s32.totalorder %s18, 3
    %p167 = por %p165, %p166
    %p169 = scmp.ne.s32.totalorder %s154, %s168
    %p170 = scmp.eq.s32.totalorder %s18, 0
    %p171 = por %p169, %p170
    %s172 = ssub.s32 %s19, %s31
    %s173 = ssub.s32 %s20, %s27
    %s174 = sor.u32 %s172, %s173
    %p175 = scmp.eq.s32.totalorder %s174, 0
    %s177 = sadd.s32 %s176, 1
    %s178 = scalar_select %p175, %s176, %s177
    %p181 = pneg %p175
    %p182 = scmp.eq.s32.totalorder %s12, 3
    %p183 = por %p181, %p182
    %p184 = scmp.ne.s32.totalorder %s176, %s179
    %p185 = scmp.eq.s32.totalorder %s12, 0
    %p186 = por %p184, %p185
    %p187 = scmp.ne.s32.totalorder %s176, %s179
    %p188 = scmp.eq.s32.totalorder %s17, 3
    %p189 = por %p187, %p188
    %p190 = scmp.ne.s32.totalorder %s179, %s180
    %p191 = scmp.eq.s32.totalorder %s17, 0
    %p192 = por %p190, %p191
    %p193 = scmp.ne.s32.totalorder %s179, %s180
    %p194 = scmp.eq.s32.totalorder %s18, 3
    %p195 = por %p193, %p194
    %p197 = scmp.ne.s32.totalorder %s180, %s196
    %p198 = scmp.eq.s32.totalorder %s18, 0
    %p199 = por %p197, %p198
    %p200 = scmp.le.s32.totalorder 1, %s12
    %p201 = scmp.lt.s32.totalorder %s12, 5
    %p202 = pnand %p200, %p201
    %p203 = pneg %p202
    // Predicated region
    $region9: #{depthwise_separable_conv.1} parent=5 // pred_check
      _
    $region10: #{depthwise_separable_conv.1} parent=5 // pred_check_branch
      %205 = sbr.rel (%p202) target = $region12
    $region11: #{depthwise_separable_conv.1} parent=5 // pred_region
      %s206 = ssub.s32 %s12, 1
      // Predicated region
      $region13: #{depthwise_separable_conv.1} parent=11 // pred_check
        %p207 = pneg %p101
      $region14: #{depthwise_separable_conv.1} parent=11 // pred_check_branch
        %209 = sbr.rel (%p207) target = $region16
      $region15: #{depthwise_separable_conv.1} parent=11 // pred_region
        _
      $region16: #{depthwise_separable_conv.1} parent=11 // pred_fallthru
        _
      // Predicated region
      $region17: #{depthwise_separable_conv.1} parent=11 // pred_check
        %p210 = pneg %p122
      $region18: #{depthwise_separable_conv.1} parent=11 // pred_check_branch
        %212 = sbr.rel (%p210) target = $region20
      $region19: #{depthwise_separable_conv.1} parent=11 // pred_region
        _
      $region20: #{depthwise_separable_conv.1} parent=11 // pred_fallthru
        _
      // Predicated region
      $region21: #{depthwise_separable_conv.1} parent=11 // pred_check
        %p213 = pneg %p143
      $region22: #{depthwise_separable_conv.1} parent=11 // pred_check_branch
        %215 = sbr.rel (%p213) target = $region24
      $region23: #{depthwise_separable_conv.1} parent=11 // pred_region
        _
      $region24: #{depthwise_separable_conv.1} parent=11 // pred_fallthru
        _
      // Predicated region
      $region25: #{depthwise_separable_conv.1} parent=11 // pred_check
        %p216 = pneg %p164
      $region26: #{depthwise_separable_conv.1} parent=11 // pred_check_branch
        %218 = sbr.rel (%p216) target = $region28
      $region27: #{depthwise_separable_conv.1} parent=11 // pred_region
        _
      $region28: #{depthwise_separable_conv.1} parent=11 // pred_fallthru
        _
    $region12: #{depthwise_separable_conv.1} parent=5 // pred_fallthru
      _
    %p219 = scmp.lt.s32.totalorder %s12, 4
    // Predicated region
    $region29: #{depthwise_separable_conv.1} parent=5 // pred_check
      %p220 = pneg %p219
    $region30: #{depthwise_separable_conv.1} parent=5 // pred_check_branch
      %222 = sbr.rel (%p220) target = $region32
    $region31: #{depthwise_separable_conv.1} parent=5 // pred_region
      // Predicated region
      $region33: #{depthwise_separable_conv.1} parent=31 // pred_check
        %p223 = pneg %p46
      $region34: #{depthwise_separable_conv.1} parent=31 // pred_check_branch
        %225 = sbr.rel (%p223) target = $region36
      $region35: #{depthwise_separable_conv.1} parent=31 // pred_region
        %p226 = scmp.lt.s32.totalorder %s19, 1
        %s227 = scalar_select %p226, %s19, 1
        %p228 = scmp.lt.s32.totalorder %s20, 1
        %s229 = scalar_select %p228, %s20, 1
        %s230 = smul.addr %s227, 2
        %s231 = sadd.s32 %s229, %s230
        %s232 = smul.addr %s231, 4
        %s233 = scalar_lea.vmem %s0, %s232
      $region36: #{depthwise_separable_conv.1} parent=31 // pred_fallthru
        _
      // Predicated region
      $region37: #{depthwise_separable_conv.1} parent=31 // pred_check
        %p234 = pneg %p74
      $region38: #{depthwise_separable_conv.1} parent=31 // pred_check_branch
        %236 = sbr.rel (%p234) target = $region40
      $region39: #{depthwise_separable_conv.1} parent=31 // pred_region
        %p237 = scmp.lt.s32.totalorder %s19, 1
        %s238 = scalar_select %p237, %s19, 1
        %p239 = scmp.lt.s32.totalorder %s20, 1
        %s240 = scalar_select %p239, %s20, 1
        %s241 = smul.addr %s240, 2
        %s242 = smul.addr %s238, 4
        %s243 = sadd.s32 %s241, %s242
        %s244 = smul.addr %s243, 4
        %s245 = scalar_lea.vmem %s1, %s244
      $region40: #{depthwise_separable_conv.1} parent=31 // pred_fallthru
        _
    $region32: #{depthwise_separable_conv.1} parent=5 // pred_fallthru
      _
    %p246 = scmp.le.s32.totalorder 1, %s12
    %p247 = scmp.lt.s32.totalorder %s12, 5
    %p248 = pnand %p246, %p247
    %p249 = pneg %p248
    // Predicated region
    $region41: #{depthwise_separable_conv.1} parent=5 // pred_check
      _
    $region42: #{depthwise_separable_conv.1} parent=5 // pred_check_branch
      %251 = sbr.rel (%p248) target = $region44
    $region43: #{depthwise_separable_conv.1} parent=5 // pred_region
      %s252 = ssub.s32 %s12, 1
      %p253 = scmp.lt.s32.totalorder %s21, 1
      %s254 = scalar_select %p253, %s21, 1
      %p255 = scmp.lt.s32.totalorder %s22, 1
      %s256 = scalar_select %p255, %s22, 1
      %s257 = smul.addr %s254, 2
      %s258 = sadd.s32 %s256, %s257
      %s259 = smul.addr %s258, 4
      %s260 = scalar_lea.vmem %s0, %s259
      %p261 = pneg %p52
      %p262 = pneg %p49
      %p263 = scmp.lt.s32.totalorder %s21, 1
      %s264 = scalar_select %p263, %s21, 1
      %p265 = scmp.lt.s32.totalorder %s22, 1
      %s266 = scalar_select %p265, %s22, 1
      %s267 = smul.addr %s266, 2
      %s268 = smul.addr %s264, 4
      %s269 = sadd.s32 %s267, %s268
      %s270 = smul.addr %s269, 4
      %s271 = scalar_lea.vmem %s1, %s270
      %p272 = pneg %p80
      %p273 = pneg %p77
      %p274 = pneg %p101
      %p275 = pneg %p98
      %p276 = pneg %p122
      %p277 = pneg %p119
      %p278 = pneg %p143
      %p279 = pneg %p140
      %p280 = pneg %p164
      %p281 = pneg %p161
      %p282 = pneg %p192
      %p283 = pneg %p189
      %p284 = scmp.lt.s32.totalorder %s21, 1
      %s285 = scalar_select %p284, %s21, 1
      %p286 = scmp.lt.s32.totalorder %s22, 1
      %s287 = scalar_select %p286, %s22, 1
      %s288 = smul.addr %s285, 2
      %s289 = sadd.s32 %s287, %s288
      %s290 = smul.addr %s289, 8
      %s291 = scalar_lea.vmem %s6, %s290
      %p292 = scmp.lt.s32.totalorder %s21, 1
      %s293 = scalar_select %p292, %s21, 1
      %p294 = scmp.lt.s32.totalorder %s22, 1
      %s295 = scalar_select %p294, %s22, 1
      %s296 = smul.addr %s293, 2
      %s297 = sadd.s32 %s295, %s296
      %s298 = smul.addr %s297, 4
      %s299 = scalar_lea.vmem %s0, %s298
      %p300 = scmp.lt.s32.totalorder %s21, 1
      %s301 = scalar_select %p300, %s21, 1
      %p302 = scmp.lt.s32.totalorder %s22, 1
      %s303 = scalar_select %p302, %s22, 1
      %s304 = smul.addr %s303, 2
      %s305 = smul.addr %s301, 4
      %s306 = sadd.s32 %s304, %s305
      %s307 = smul.addr %s306, 4
      %s308 = scalar_lea.vmem %s1, %s307
      %p309 = scmp.lt.s32.totalorder %s21, 1
      %s310 = scalar_select %p309, %s21, 1
      %p311 = scmp.lt.s32.totalorder %s22, 1
      %s312 = scalar_select %p311, %s22, 1
      %s313 = smul.addr %s310, 2
      %s314 = sadd.s32 %s312, %s313
      %s315 = smul.addr %s314, 8
      %s316 = scalar_lea.vmem %s6, %s315
      %v317 = vld [vmem:[%s299] sm:$0xf]
      %v318 = vld [vmem:[%s308] sm:$0xf]
      %s319 = scalar_lea.vmem %s308, 4
      %v320 = vld [vmem:[%s319] sm:$0xf]
      %322 = vrot.lane.b32.xlu0 %v318, 1
      %v323 = vpop.permute.xlu0 %322
      %326 = vrot.lane.b32.xlu0 %v317, 17
      %v327 = vpop.permute.xlu0 %326
      %330 = vrot.lane.b32.xlu0 %v320, 17
      %v331 = vpop.permute.xlu0 %330
      %vm333 = vcmask 7168
      %v334 = vsel %vm333, 0.0, %v323
      %vm335 = vcmask 138240
      %v336 = vsel %vm335, %v334, %v327
      %v337 = vsel %vm335, %v327, %v331
      %vm338 = vcmask 269312
      %v339 = vsel %vm338, %v337, 0.0
      %v340 = vld [vmem:[%s2] sm:$0x1]
      %v341 = vld [vmem:[%s2 + $0x1] sm:$0x1]
      %v342 = vld [vmem:[%s3] sm:$0xf]
      %344 = vset.pattern.permute.xlu0 0
      %345 = vperm.xlu0 %344, %v342
      %v346 = vpop.permute.xlu0 %345
      %v348 = vmul.f32 %v336, %v346
      %349 = vset.pattern.permute.xlu0 3
      %350 = vperm.xlu0 %349, %v342
      %v351 = vpop.permute.xlu0 %350
      %v353 = vmul.f32 %v336, %v351
      %v354 = vmul.f32 %v339, %v351
      %357 = vrot.lane.b32.xlu0 %v353, 112
      %v358 = vpop.permute.xlu0 %357
      %359 = vrot.lane.b32.xlu0 %v354, 112
      %v360 = vpop.permute.xlu0 %359
      %vm361 = vcmask 916480
      %v362 = vsel %vm361, %v358, %v360
      %v364 = vadd.f32 %v348, %v362
      %365 = vset.pattern.permute.xlu0 6
      %366 = vperm.xlu0 %365, %v342
      %v367 = vpop.permute.xlu0 %366
      %v369 = vmul.f32 %v336, %v367
      %v370 = vmul.f32 %v339, %v367
      %373 = vrot.lane.b32.xlu0 %v369, 96
      %v374 = vpop.permute.xlu0 %373
      %375 = vrot.lane.b32.xlu0 %v370, 96
      %v376 = vpop.permute.xlu0 %375
      %vm377 = vcmask 785408
      %v378 = vsel %vm377, %v374, %v376
      %v380 = vadd.f32 %v364, %v378
      %v381 = vperm.slane %v340, 0
      %v382 = vmul.f32 %v380, %v381
      %383 = vset.pattern.permute.xlu0 1
      %384 = vperm.xlu0 %383, %v342
      %v385 = vpop.permute.xlu0 %384
      %v387 = vmul.f32 %v336, %v385
      %v388 = vmul.f32 %v339, %v385
      %389 = vset.pattern.permute.xlu0 4
      %390 = vperm.xlu0 %389, %v342
      %v391 = vpop.permute.xlu0 %390
      %v393 = vmul.f32 %v336, %v391
      %v394 = vmul.f32 %v339, %v391
      %397 = vrot.lane.b32.xlu0 %v393, 112
      %v398 = vpop.permute.xlu0 %397
      %399 = vrot.lane.b32.xlu0 %v394, 112
      %v400 = vpop.permute.xlu0 %399
      %v401 = vsel %vm361, %v398, %v400
      %v404 = vadd.f32 %v387, %v401
      %v405 = vadd.f32 %v388, %v400
      %406 = vset.pattern.permute.xlu0 7
      %407 = vperm.xlu0 %406, %v342
      %v408 = vpop.permute.xlu0 %407
      %v410 = vmul.f32 %v336, %v408
      %v411 = vmul.f32 %v339, %v408
      %414 = vrot.lane.b32.xlu0 %v410, 96
      %v415 = vpop.permute.xlu0 %414
      %416 = vrot.lane.b32.xlu0 %v411, 96
      %v417 = vpop.permute.xlu0 %416
      %v418 = vsel %vm377, %v415, %v417
      %v421 = vadd.f32 %v404, %v418
      %v422 = vadd.f32 %v405, %v417
      %425 = vrot.lane.b32.xlu0 %v421, 127
      %v426 = vpop.permute.xlu0 %425
      %427 = vrot.lane.b32.xlu0 %v422, 127
      %v428 = vpop.permute.xlu0 %427
      %vm429 = vcmask 1039360
      %v430 = vsel %vm429, %v426, %v428
      %v432 = vadd.f32 %v382, %v430
      %433 = vset.pattern.permute.xlu0 2
      %434 = vperm.xlu0 %433, %v342
      %v435 = vpop.permute.xlu0 %434
      %v437 = vmul.f32 %v336, %v435
      %v438 = vmul.f32 %v339, %v435
      %439 = vset.pattern.permute.xlu0 5
      %440 = vperm.xlu0 %439, %v342
      %v441 = vpop.permute.xlu0 %440
      %v443 = vmul.f32 %v336, %v441
      %v444 = vmul.f32 %v339, %v441
      %447 = vrot.lane.b32.xlu0 %v443, 112
      %v448 = vpop.permute.xlu0 %447
      %449 = vrot.lane.b32.xlu0 %v444, 112
      %v450 = vpop.permute.xlu0 %449
      %v451 = vsel %vm361, %v448, %v450
      %v454 = vadd.f32 %v437, %v451
      %v455 = vadd.f32 %v438, %v450
      %456 = vset.pattern.permute.xlu0 8
      %457 = vperm.xlu0 %456, %v342
      %v458 = vpop.permute.xlu0 %457
      %v460 = vmul.f32 %v336, %v458
      %v461 = vmul.f32 %v339, %v458
      %464 = vrot.lane.b32.xlu0 %v460, 96
      %v465 = vpop.permute.xlu0 %464
      %466 = vrot.lane.b32.xlu0 %v461, 96
      %v467 = vpop.permute.xlu0 %466
      %v468 = vsel %vm377, %v465, %v467
      %v471 = vadd.f32 %v454, %v468
      %v472 = vadd.f32 %v455, %v467
      %v473 = vperm.slane %v341, 0
      %475 = vrot.lane.b32.xlu0 %v473, 2
      %v476 = vpop.permute.xlu0 %475
      %v478 = vmul.f32 %v471, %v476
      %v479 = vmul.f32 %v472, %v476
      %482 = vrot.lane.b32.xlu0 %v478, 126
      %v483 = vpop.permute.xlu0 %482
      %484 = vrot.lane.b32.xlu0 %v479, 126
      %v485 = vpop.permute.xlu0 %484
      %vm486 = vcmask 1031168
      %v487 = vsel %vm486, %v483, %v485
      %v489 = vadd.f32 %v432, %v487
      %v490 = vld [vmem:[%s4] sm:$0xff]
      %v491 = vld [vmem:[%s5] sm:$0xff]
      %493 = vset.pattern.permute.xlu0 0
      %494 = vperm.xlu0 %493, %v491
      %v495 = vpop.permute.xlu0 %494
      %vm497 = vcmask 31744
      %v499 = vsel %vm497, %v490, 0
      %vm501 = vcmask 1043456
      %v503 = vsel %vm501, %v489, 0
      %505 = vmatpush.msra.mxu0 0.0
      %506 = vmatpush.msra.mxu0 0.0
      %507 = vmatpush.msra.mxu0 0.0
      %508 = vmatpush.msra.mxu0 0.0
      %509 = vmatpush.msra.mxu0 0.0
      %510 = vmatpush.msra.mxu0 0.0
      %511 = vmatpush.msra.mxu0 0.0
      %512 = vmatpush.msra.mxu0 0.0
      %513 = vmatpush.msra.mxu0 0.0
      %514 = vmatpush.msra.mxu0 0.0
      %515 = vmatpush.msra.mxu0 0.0
      %516 = vmatpush.msra.mxu0 0.0
      %517 = vmatpush.msra.mxu0 0.0
      %518 = vmatpush.msra.mxu0 0.0
      %519 = vmatpush.msra.mxu0 0.0
      %520 = vmatpush.msra.mxu0 %v503
      %521 = vmatmul.f32.gmra.mxu0 %v499
      %v522 = vpop.f32.mrf.mxu0
      %v523 = vadd.f32 %v495, %v522
      %524 = vdwg.mxu0
      %525 = vst [vmem:[%s316] sm:$0xff] %v523
      %p526 = scmp.lt.s32.totalorder %s21, 1
      %s527 = scalar_select %p526, %s21, 1
      %p528 = scmp.lt.s32.totalorder %s22, 1
      %s529 = scalar_select %p528, %s22, 1
      %s530 = smul.addr %s527, 2
      %s531 = sadd.s32 %s529, %s530
      %s532 = smul.addr %s531, 8
      %s533 = scalar_lea.vmem %s6, %s532
      // Predicated region
      $region45: #{depthwise_separable_conv.1} parent=43 // pred_check
        %p534 = pneg %p189
      $region46: #{depthwise_separable_conv.1} parent=43 // pred_check_branch
        %536 = sbr.rel (%p534) target = $region48
      $region47: #{depthwise_separable_conv.1} parent=43 // pred_region
        _
      $region48: #{depthwise_separable_conv.1} parent=43 // pred_fallthru
        _
    $region44: #{depthwise_separable_conv.1} parent=5 // pred_fallthru
      _
    %p537 = scmp.le.s32.totalorder 2, %s12
    // Predicated region
    $region49: #{depthwise_separable_conv.1} parent=5 // pred_check
      %p538 = pneg %p537
    $region50: #{depthwise_separable_conv.1} parent=5 // pred_check_branch
      %540 = sbr.rel (%p538) target = $region52
    $region51: #{depthwise_separable_conv.1} parent=5 // pred_region
      %s541 = ssub.s32 %s12, 2
      // Predicated region
      $region53: #{depthwise_separable_conv.1} parent=51 // pred_check
        %p542 = pneg %p195
      $region54: #{depthwise_separable_conv.1} parent=51 // pred_check_branch
        %544 = sbr.rel (%p542) target = $region56
      $region55: #{depthwise_separable_conv.1} parent=51 // pred_region
        %p545 = scmp.lt.s32.totalorder %s23, 1
        %s546 = scalar_select %p545, %s23, 1
        %p547 = scmp.lt.s32.totalorder %s24, 1
        %s548 = scalar_select %p547, %s24, 1
        %s549 = smul.addr %s546, 2
        %s550 = sadd.s32 %s548, %s549
        %s551 = smul.addr %s550, 8
        %s552 = scalar_lea.vmem %s6, %s551
      $region56: #{depthwise_separable_conv.1} parent=51 // pred_fallthru
        _
    $region52: #{depthwise_separable_conv.1} parent=5 // pred_fallthru
      _
  $region6: #{depthwise_separable_conv.1} parent=0 // loop_footer
    %s16 = sadd.s32 1, %s12
  $region7: #{depthwise_separable_conv.1} parent=0 // loop_footer_branch
    %11 = sbr.rel target = $region3
  $region8: #{depthwise_separable_conv.1} parent=0 // loop_exit
    _

</llo_original>
